<compile_context>
chip_gen: v7x
topology: tpu7x:2x2x1
jax: 0.10.0
libtpu: 0.0.40
codegen_flags: <defaults>
</compile_context>

<pallas_src>
import jax
import jax.numpy as jnp
from jax import lax
from jax.experimental import pallas as pl
from jax.experimental.pallas import tpu as pltpu


_TARGET_BLOCK_BYTES = 8 * 1024 * 1024   # per-input-block size (Pallas double-buffers it)
_VMEM_LIMIT_BYTES = 40 * 1024 * 1024    # > v5e's 16 MiB default scoped, < v7x's 64 MiB physical
_MAX_ROW_TILE = 8192


def _round_up(a: int, b: int) -> int:
    return (a + b - 1) // b * b


def _choose_tiles(nc: int, hw: int, dtype_bytes: int):
    # HW tile: multiple of 128 (lane dim); capped so the row tile can stay
    # >= 128 rows at the target block size.
    hw_cap = max(128, (_TARGET_BLOCK_BYTES // (128 * dtype_bytes)) // 128 * 128)
    hw_tile = min(_round_up(hw, 128), hw_cap)
    # Row tile: multiple of 8 (sublane dim); as large as the byte budget allows.
    rows_budget = max(8, (_TARGET_BLOCK_BYTES // (hw_tile * dtype_bytes)) // 8 * 8)
    row_tile = min(_round_up(nc, 8), _MAX_ROW_TILE, rows_budget)
    return row_tile, hw_tile


def _make_pool_kernel(hw_total: int, hw_tile: int):
    need_mask = (hw_total % hw_tile) != 0
    inv_hw = 1.0 / float(hw_total)

    def kernel(x_ref, avg_ref, max_ref, sum_acc, max_acc):
        k = pl.program_id(1)

        @pl.when(k == 0)
        def _init():
            sum_acc[...] = jnp.zeros_like(sum_acc)
            max_acc[...] = jnp.full_like(max_acc, -jnp.inf)

        # Accumulate in f32 (matters for bf16/fp16 inputs); the extra VPU work
        # is free filler since the kernel is HBM-bandwidth bound.
        x = x_ref[...].astype(jnp.float32)
        if need_mask:
            # Last HW block is partial: mask padded lanes (0 for sum, -inf for max).
            col = lax.broadcasted_iota(jnp.int32, x.shape, 1) + k * hw_tile
            valid = col < hw_total
            x_sum = jnp.where(valid, x, 0.0)
            x_max = jnp.where(valid, x, -jnp.inf)
        else:
            x_sum = x
            x_max = x

        sum_acc[...] += jnp.sum(x_sum, axis=-1, keepdims=True)
        max_acc[...] = jnp.maximum(max_acc[...],
                                   jnp.max(x_max, axis=-1, keepdims=True))

        @pl.when(k == pl.num_programs(1) - 1)
        def _finalize():
            avg_ref[...] = (sum_acc[...] * inv_hw).astype(avg_ref.dtype)
            max_ref[...] = max_acc[...].astype(max_ref.dtype)

    return kernel


def adaptive_concat_pool(x: jax.Array) -> jax.Array:
    """x: (N, C, H, W) -> (N, 2*C, 1, 1); concat of global avg and max pool."""
    # TODO(synk): only pool=1 (global pooling) is implemented, matching the module default.
    N, C, H, W = x.shape
    NC, HW = N * C, H * W
    x2d = x.reshape(NC, HW)

    dtype_bytes = jnp.dtype(x.dtype).itemsize
    row_tile, hw_tile = _choose_tiles(NC, HW, dtype_bytes)
    grid = (pl.cdiv(NC, row_tile), pl.cdiv(HW, hw_tile))

    kernel = _make_pool_kernel(HW, hw_tile)

    avg2d, max2d = pl.pallas_call(
        kernel,
        out_shape=(
            jax.ShapeDtypeStruct((NC, 1), x.dtype),
            jax.ShapeDtypeStruct((NC, 1), x.dtype),
        ),
        grid_spec=pltpu.PrefetchScalarGridSpec(
            num_scalar_prefetch=0,
            grid=grid,
            in_specs=[pl.BlockSpec((row_tile, hw_tile), lambda i, k: (i, k))],
            out_specs=[
                pl.BlockSpec((row_tile, 1), lambda i, k: (i, 0)),
                pl.BlockSpec((row_tile, 1), lambda i, k: (i, 0)),
            ],
            scratch_shapes=[
                pltpu.VMEM((row_tile, 1), jnp.float32),  # sum accumulator
                pltpu.VMEM((row_tile, 1), jnp.float32),  # max accumulator
            ],
        ),
        compiler_params=pltpu.CompilerParams(
            dimension_semantics=("parallel", "arbitrary"),
            vmem_limit_bytes=_VMEM_LIMIT_BYTES,
        ),
    )(x2d)

    avg = avg2d.reshape(N, C, 1, 1)
    mx = max2d.reshape(N, C, 1, 1)
    return jnp.concatenate([avg, mx], axis=1)


def _reference(x):
    return jnp.concatenate(
        [jnp.mean(x, axis=(2, 3), keepdims=True),
         jnp.max(x, axis=(2, 3), keepdims=True)],
        axis=1,
    )


if __name__ == "__main__":
    key = jax.random.PRNGKey(0)

    # Primary case: NCHW input, global concat pool.
    x = jax.random.normal(key, (2, 4, 16, 16), dtype=jnp.float32)
    out = jax.block_until_ready(adaptive_concat_pool(x))
    ref = _reference(x)
    assert out.shape == (2, 8, 1, 1), out.shape
    assert jnp.allclose(out, ref, atol=1e-5, rtol=1e-5)

    # Ragged case: NC not a multiple of 8, HW not a multiple of 128, and
    # all-negative values (exercises the -inf lane masking on the max path).
    x2 = jax.random.normal(jax.random.PRNGKey(0), (2, 3, 7, 7), dtype=jnp.float32) - 10.0
    out2 = jax.block_until_ready(adaptive_concat_pool(x2))
    ref2 = _reference(x2)
    assert out2.shape == (2, 6, 1, 1), out2.shape
    assert jnp.allclose(out2, ref2, atol=1e-5, rtol=1e-5)

    print("KERNEL_OK")
</pallas_src>

<mosaic_0001>
module attributes {stable_mosaic.version = 11 : i64} {
  func.func @kernel(%arg0: i32, %arg1: i32, %arg2: memref<8x256xf32, #tpu.memory_space<vmem>>, %arg3: memref<8x1xf32, #tpu.memory_space<vmem>>, %arg4: memref<8x1xf32, #tpu.memory_space<vmem>>, %arg5: memref<8x1xf32, #tpu.memory_space<vmem>>, %arg6: memref<8x1xf32, #tpu.memory_space<vmem>>) attributes {dimension_semantics = [#tpu.dimension_semantics<parallel>, #tpu.dimension_semantics<arbitrary>], iteration_bounds = array<i64: 1, 1>, scalar_prefetch = 0 : i64, scratch_operands = 2 : i64, tpu.core_type = #tpu.core_type<tc>, window_params = [{transform_indices = @transform_0, window_bounds = array<i64: 8, 256>}, {transform_indices = @transform_1, window_bounds = array<i64: 8, 1>}, {transform_indices = @transform_2, window_bounds = array<i64: 8, 1>}]} {
    %c0_i32 = arith.constant 0 : i32
    %0 = arith.cmpi eq, %arg1, %c0_i32 : i32
    %1 = arith.extui %0 : i1 to i32
    %c0_i32_0 = arith.constant 0 : i32
    %2 = arith.cmpi ne, %1, %c0_i32_0 : i32
    scf.if %2 {
      %cst_13 = arith.constant 0.000000e+00 : f32
      %17 = vector.broadcast %cst_13 : f32 to vector<8x1xf32>
      %c0_14 = arith.constant 0 : index
      %c0_15 = arith.constant 0 : index
      %18 = vector.load %arg5[%c0_14, %c0_15] : memref<8x1xf32, #tpu.memory_space<vmem>>, vector<8x1xf32>
      tpu.vector_store %arg5[%c0_14, %c0_15], %17 {strides = array<i32>} : memref<8x1xf32, #tpu.memory_space<vmem>>, vector<8x1xf32>,
      %cst_16 = arith.constant 0xFF800000 : f32
      %19 = vector.broadcast %cst_16 : f32 to vector<8x1xf32>
      %c0_17 = arith.constant 0 : index
      %c0_18 = arith.constant 0 : index
      %20 = vector.load %arg6[%c0_17, %c0_18] : memref<8x1xf32, #tpu.memory_space<vmem>>, vector<8x1xf32>
      tpu.vector_store %arg6[%c0_17, %c0_18], %19 {strides = array<i32>} : memref<8x1xf32, #tpu.memory_space<vmem>>, vector<8x1xf32>,
    } else {
    }
    %c0 = arith.constant 0 : index
    %c0_1 = arith.constant 0 : index
    %3 = vector.load %arg2[%c0, %c0_1] : memref<8x256xf32, #tpu.memory_space<vmem>>, vector<8x256xf32>
    %c0_2 = arith.constant 0 : index
    %c0_3 = arith.constant 0 : index
    %4 = vector.load %arg5[%c0_2, %c0_3] : memref<8x1xf32, #tpu.memory_space<vmem>>, vector<8x1xf32>
    %cst = arith.constant dense<0.000000e+00> : vector<8xf32>
    %5 = vector.multi_reduction <add>, %3, %cst [1] : vector<8x256xf32> to vector<8xf32>
    %6 = vector.shape_cast %5 : vector<8xf32> to vector<8x1xf32>
    %7 = arith.addf %4, %6 : vector<8x1xf32>
    %c0_4 = arith.constant 0 : index
    %c0_5 = arith.constant 0 : index
    %8 = vector.load %arg5[%c0_4, %c0_5] : memref<8x1xf32, #tpu.memory_space<vmem>>, vector<8x1xf32>
    tpu.vector_store %arg5[%c0_4, %c0_5], %7 {strides = array<i32>} : memref<8x1xf32, #tpu.memory_space<vmem>>, vector<8x1xf32>,
    %c0_6 = arith.constant 0 : index
    %c0_7 = arith.constant 0 : index
    %9 = vector.load %arg6[%c0_6, %c0_7] : memref<8x1xf32, #tpu.memory_space<vmem>>, vector<8x1xf32>
    %cst_8 = arith.constant dense<0xFF800000> : vector<8xf32>
    %10 = vector.multi_reduction <maximumf>, %3, %cst_8 [1] : vector<8x256xf32> to vector<8xf32>
    %11 = vector.shape_cast %10 : vector<8xf32> to vector<8x1xf32>
    %12 = arith.maximumf %9, %11 : vector<8x1xf32>
    %c0_9 = arith.constant 0 : index
    %c0_10 = arith.constant 0 : index
    %13 = vector.load %arg6[%c0_9, %c0_10] : memref<8x1xf32, #tpu.memory_space<vmem>>, vector<8x1xf32>
    tpu.vector_store %arg6[%c0_9, %c0_10], %12 {strides = array<i32>} : memref<8x1xf32, #tpu.memory_space<vmem>>, vector<8x1xf32>,
    %c0_i32_11 = arith.constant 0 : i32
    %14 = arith.cmpi eq, %arg1, %c0_i32_11 : i32
    %15 = arith.extui %14 : i1 to i32
    %c0_i32_12 = arith.constant 0 : i32
    %16 = arith.cmpi ne, %15, %c0_i32_12 : i32
    scf.if %16 {
      %c0_13 = arith.constant 0 : index
      %c0_14 = arith.constant 0 : index
      %17 = vector.load %arg5[%c0_13, %c0_14] : memref<8x1xf32, #tpu.memory_space<vmem>>, vector<8x1xf32>
      %cst_15 = arith.constant 3.906250e-03 : f32
      %18 = vector.broadcast %cst_15 : f32 to vector<8x1xf32>
      %19 = arith.mulf %17, %18 : vector<8x1xf32>
      %c0_16 = arith.constant 0 : index
      %c0_17 = arith.constant 0 : index
      %20 = vector.load %arg3[%c0_16, %c0_17] : memref<8x1xf32, #tpu.memory_space<vmem>>, vector<8x1xf32>
      tpu.vector_store %arg3[%c0_16, %c0_17], %19 {strides = array<i32>} : memref<8x1xf32, #tpu.memory_space<vmem>>, vector<8x1xf32>,
      %c0_18 = arith.constant 0 : index
      %c0_19 = arith.constant 0 : index
      %21 = vector.load %arg6[%c0_18, %c0_19] : memref<8x1xf32, #tpu.memory_space<vmem>>, vector<8x1xf32>
      %c0_20 = arith.constant 0 : index
      %c0_21 = arith.constant 0 : index
      %22 = vector.load %arg4[%c0_20, %c0_21] : memref<8x1xf32, #tpu.memory_space<vmem>>, vector<8x1xf32>
      tpu.vector_store %arg4[%c0_20, %c0_21], %21 {strides = array<i32>} : memref<8x1xf32, #tpu.memory_space<vmem>>, vector<8x1xf32>,
    } else {
    }
    return
  }
  func.func @transform_0(%arg0: i32, %arg1: i32) -> (i32, i32) {
    %c0_i32 = arith.constant 0 : i32
    return %arg0, %arg1 : i32, i32
  }
  func.func @transform_1(%arg0: i32, %arg1: i32) -> (i32, i32) {
    %c0_i32 = arith.constant 0 : i32
    %c0_i32_0 = arith.constant 0 : i32
    return %arg0, %c0_i32 : i32, i32
  }
  func.func @transform_2(%arg0: i32, %arg1: i32) -> (i32, i32) {
    %c0_i32 = arith.constant 0 : i32
    %c0_i32_0 = arith.constant 0 : i32
    return %arg0, %c0_i32 : i32, i32
  }
}

</mosaic_0001>

<llo_original>
// kernel: tpu_custom_call.1
$region0: #{tpu_custom_call.1}
  #allocation0 [shape = 'u32[]', space=smem, size = 0x4, offset = 0x4, fixed_abs, tag = 'smem constant byte address 0x4 - core index']
  #allocation1 [shape = 'u32[144,128]{1,0:T(1,128)}', space=vmem, size = 0x12000, scoped, tag = 'internal scratch']
  #allocation2 [shape = 'f32[8,1]{1,0:T(8,128)}', space=vmem, size = 0x1000, scoped, tag = 'scratch operand']
  #allocation3 [shape = 'f32[8,1]{1,0:T(8,128)}', space=vmem, size = 0x1000, scoped, tag = 'scratch operand']
  %s0 = inlined_call_operand.hbm [shape: f32[8,256], index: 0, kind: input, shape index: {}]
  %s1 = inlined_call_operand.vmem [shape: f32[8,1], index: 1, kind: output, shape index: {0}]
  %s2 = inlined_call_operand.vmem [shape: f32[8,1], index: 2, kind: output, shape index: {1}]
  %3 = xla_tuple %s1, %s2
  %s4 = sld [smem:[#allocation0]]
  $region34: #{tpu_custom_call.1} parent=0
    _
  %s6 = ssub.s32 1, %s4
  %s7 = scalar_select 0, %s6, %s4
  $region1: #{tpu_custom_call.1} parent=0
    #allocation4 [shape = 'u8[8192]{0}', space=vmem, size = 0x2000, scoped, tag = 'input window, operand 0, single buffered']
    #allocation5 [shape = 's32[1]{0}', space=sflag, size = 0x4, scoped, tag = 'scoped memory for tpu_custom_call.1']
    %8 = vsyncpa [#allocation5], 0
    // Predicated region
    $region2: #{tpu_custom_call.1} parent=1 // pred_check
      _
    $region3: #{tpu_custom_call.1} parent=1 // pred_check_branch
      %10 = sbr.rel (0) target = $region5
    $region4: #{tpu_custom_call.1} parent=1 // pred_region
      %s12 = ssub.s32 256, 256
      %13 = vsyncadd [#allocation5], %s12
      %s15 = sshll.u32 [#allocation4], 4
      %s16 = int_to_ptr.vmem [resolvable:$true] %s15
      %18 = dma.hbm_to_vmem [thread:$0]  %s0, 256, %s16, [#allocation5]
    $region5: #{tpu_custom_call.1} parent=1 // pred_fallthru
      _
    // Predicated region
    $region6: #{tpu_custom_call.1} parent=1 // pred_check
      _
    $region7: #{tpu_custom_call.1} parent=1 // pred_check_branch
      %20 = sbr.rel (0) target = $region9
    $region8: #{tpu_custom_call.1} parent=1 // pred_region
      %21 = dma.done [#allocation5], 256
    $region9: #{tpu_custom_call.1} parent=1 // pred_fallthru
      _
    %p22 = scmp.eq.s32.totalorder 0, 0
    // Predicated region
    $region10: #{tpu_custom_call.1} parent=1 // pred_check
      %p23 = pneg %p22
    $region11: #{tpu_custom_call.1} parent=1 // pred_check_branch
      %25 = sbr.rel (%p23) target = $region13
    $region12: #{tpu_custom_call.1} parent=1 // pred_region
      %vm26 = vcmask 7168
      %27 = vst.msk [vmem:[#allocation2] sm:$0xff] %vm26, 0.0
      %28 = vst.msk [vmem:[#allocation3] sm:$0xff] %vm26, -inf
    $region13: #{tpu_custom_call.1} parent=1 // pred_fallthru
      _
    %v29 = vld [vmem:[#allocation4] sm:$0xff]
    %v30 = vld [vmem:[#allocation4 + $0x8] sm:$0xff]
    %v31 = vld [vmem:[#allocation2] sm:$0xff]
    %v32 = vadd.f32 %v29, %v30
    %33 = vadd.xlane.f32.xlu0 %v32
    %v34 = vpop.xlane.xlu0 %33
    %v35 = vadd.f32 %v31, %v34
    %vm36 = vcmask 7168
    %37 = vst.msk [vmem:[#allocation2] sm:$0xff] %vm36, %v35
    %v38 = vld [vmem:[#allocation3] sm:$0xff]
    %v39 = vmax.f32 %v29, %v30
    %40 = vmax.xlane.f32.xlu0 %v39
    %v41 = vpop.xlane.xlu0 %40
    %v42 = vmax.f32 %v38, %v41
    %43 = vst.msk [vmem:[#allocation3] sm:$0xff] %vm36, %v42
    // Predicated region
    $region14: #{tpu_custom_call.1} parent=1 // pred_check
      %p44 = pneg %p22
    $region15: #{tpu_custom_call.1} parent=1 // pred_check_branch
      %46 = sbr.rel (%p44) target = $region17
    $region16: #{tpu_custom_call.1} parent=1 // pred_region
      %v47 = vld [vmem:[#allocation2] sm:$0xff]
      %v48 = vmul.f32 %v47, 0.00390625
      %49 = vst.msk [vmem:[%s1] sm:$0xff] %vm36, %v48
      %v50 = vld [vmem:[#allocation3] sm:$0xff]
      %51 = vst.msk [vmem:[%s2] sm:$0xff] %vm36, %v50
    $region17: #{tpu_custom_call.1} parent=1 // pred_fallthru
      _
    // Predicated region
    $region18: #{tpu_custom_call.1} parent=1 // pred_check
      _
    $region19: #{tpu_custom_call.1} parent=1 // pred_check_branch
      %53 = sbr.rel (0) target = $region21
    $region20: #{tpu_custom_call.1} parent=1 // pred_region
      _
    $region21: #{tpu_custom_call.1} parent=1 // pred_fallthru
      _
    // Predicated region
    $region22: #{tpu_custom_call.1} parent=1 // pred_check
      _
    $region23: #{tpu_custom_call.1} parent=1 // pred_check_branch
      %55 = sbr.rel (0) target = $region25
    $region24: #{tpu_custom_call.1} parent=1 // pred_region
      _
    $region25: #{tpu_custom_call.1} parent=1 // pred_fallthru
      _
    // Predicated region
    $region26: #{tpu_custom_call.1} parent=1 // pred_check
      _
    $region27: #{tpu_custom_call.1} parent=1 // pred_check_branch
      %57 = sbr.rel (0) target = $region29
    $region28: #{tpu_custom_call.1} parent=1 // pred_region
      _
    $region29: #{tpu_custom_call.1} parent=1 // pred_fallthru
      _
    // Predicated region
    $region30: #{tpu_custom_call.1} parent=1 // pred_check
      _
    $region31: #{tpu_custom_call.1} parent=1 // pred_check_branch
      %59 = sbr.rel (0) target = $region33
    $region32: #{tpu_custom_call.1} parent=1 // pred_region
      _
    $region33: #{tpu_custom_call.1} parent=1 // pred_fallthru
      _
    %60 = vsyncpa [#allocation5], 1

</llo_original>
